<compile_context>
chip_gen: v5e
topology: v5e:2x2
jax: 0.10.0
libtpu: 0.0.40
codegen_flags: <defaults>
</compile_context>

<pallas_src>
import functools
import math

import jax
import jax.numpy as jnp
from jax.experimental import pallas as pl
from jax.experimental.pallas import tpu as pltpu


def _round_up(x, m):
    return (x + m - 1) // m * m


def _pick_tiles(n, block_m, block_k):
    """Clamp requested tiles to the (padded) graph size.

    bf16 A tiles: sublane (row) dim multiple of 16, lane (col) dim multiple of
    128.  Prefer >= 2 row tiles so the 'parallel' rows axis can shard across
    both TensorCores on v7x (and balance megacore on v5e/v6e).
    """
    bm = max(16, min(block_m, _round_up(n, 16)))
    bm = _round_up(bm, 16)
    if _round_up(n, bm) // bm < 2:
        half = _round_up(max(-(-n // 2), 1), 16)
        if 16 <= half < bm:
            bm = half
    bk = max(128, min(block_k, _round_up(n, 128)))
    bk = _round_up(bk, 128)
    return bm, bk


def _vmem_limit_bytes(bm, bk, out_feats):
    """Explicit scoped-VMEM limit only when the tiles outgrow the 32 MiB default."""
    a_bytes = 2 * bm * bk * 2            # double-buffered bf16 A tiles (dominant)
    hwa_bytes = 2 * bk * out_feats * 2   # double-buffered bf16 h@Wa tiles
    hwh_bytes = 2 * bm * out_feats * 4   # double-buffered f32 h@Wh tiles
    out_bytes = 2 * bm * out_feats * 4   # double-buffered f32 resident output
    need = a_bytes + hwa_bytes + hwh_bytes + out_bytes + (1 << 20)
    if need <= 24 * 1024 * 1024:
        return None                      # default scoped limit is plenty
    # Cap comfortably under v7x's 64 MiB/TC physical VMEM.
    return min(2 * need, 48 * 1024 * 1024)


# ---------------- fused per-row-block projections: h@Wa and h@Wh ----------------
def _proj_kernel(h_ref, wa_ref, wh_ref, hwa_ref, hwh_ref):
    hb = h_ref[...].astype(jnp.bfloat16)
    hwa_ref[...] = jnp.dot(hb, wa_ref[...],
                           preferred_element_type=jnp.float32).astype(hwa_ref.dtype)
    hwh_ref[...] = jnp.dot(hb, wh_ref[...], preferred_element_type=jnp.float32)


def project_h(h, wa_bf16, wh_bf16, *, block_m):
    """Returns (h @ Wa) in bf16 (streams through the N^2 kernel) and (h @ Wh) in f32."""
    n_rows, in_feats = h.shape
    out_feats = wa_bf16.shape[1]
    return pl.pallas_call(
        _proj_kernel,
        out_shape=(jax.ShapeDtypeStruct((n_rows, out_feats), jnp.bfloat16),
                   jax.ShapeDtypeStruct((n_rows, out_feats), jnp.float32)),
        grid_spec=pltpu.PrefetchScalarGridSpec(
            num_scalar_prefetch=0,
            grid=(n_rows // block_m,),
            in_specs=[pl.BlockSpec((block_m, in_feats), lambda i: (i, 0)),
                      pl.BlockSpec((in_feats, out_feats), lambda i: (0, 0)),
                      pl.BlockSpec((in_feats, out_feats), lambda i: (0, 0))],
            out_specs=(pl.BlockSpec((block_m, out_feats), lambda i: (i, 0)),
                       pl.BlockSpec((block_m, out_feats), lambda i: (i, 0)))),
        compiler_params=pltpu.CompilerParams(dimension_semantics=("parallel",)),
    )(h, wa_bf16, wh_bf16)


# ------------------------------ main SAGE layer ----------------------------------
def _sage_layer_kernel(a_ref, hwa_ref, hwh_ref, b_ref, gamma_ref, beta_ref,
                       o_ref, *, use_ln, use_act):
    k = pl.program_id(1)

    # Output block index (i, 0) is constant over k -> o_ref stays resident in
    # VMEM across the K loop and serves as the f32 accumulator directly.
    @pl.when(k == 0)
    def _init():
        o_ref[...] = jnp.zeros_like(o_ref)

    # o += A_norm_tile @ (h @ Wa)_tile : the N^2 contraction, bf16 in / f32 acc.
    o_ref[...] += jnp.dot(a_ref[...], hwa_ref[...],
                          preferred_element_type=jnp.float32)

    @pl.when(k == pl.num_programs(1) - 1)
    def _finalize():
        z = o_ref[...] + hwh_ref[...] + b_ref[...]
        if use_ln:  # nn.LayerNorm(out_feats, elementwise_affine=True), eps=1e-5
            mean = jnp.mean(z, axis=-1, keepdims=True)
            var = jnp.mean((z - mean) ** 2, axis=-1, keepdims=True)
            z = (z - mean) * jax.lax.rsqrt(var + 1e-5)
            z = z * gamma_ref[...] + beta_ref[...]
        if use_act:  # activation = ReLU
            z = jnp.maximum(z, 0.0)
        o_ref[...] = z


def gcn_sage_layer(a_norm, hwa, hwh, b, gamma, beta, *, use_ln, use_act,
                   block_m, block_k, vmem_limit_bytes=None):
    n_rows, n_cols = a_norm.shape
    out_feats = hwa.shape[1]
    kernel = functools.partial(_sage_layer_kernel, use_ln=use_ln, use_act=use_act)
    cp_kwargs = dict(dimension_semantics=("parallel", "arbitrary"))
    if vmem_limit_bytes is not None:
        cp_kwargs["vmem_limit_bytes"] = int(vmem_limit_bytes)
    return pl.pallas_call(
        kernel,
        out_shape=jax.ShapeDtypeStruct((n_rows, out_feats), jnp.float32),
        grid_spec=pltpu.PrefetchScalarGridSpec(
            num_scalar_prefetch=0,
            grid=(n_rows // block_m, n_cols // block_k),
            in_specs=[
                pl.BlockSpec((block_m, block_k), lambda i, k: (i, k)),    # A_norm
                pl.BlockSpec((block_k, out_feats), lambda i, k: (k, 0)),  # h @ Wa
                pl.BlockSpec((block_m, out_feats), lambda i, k: (i, 0)),  # h @ Wh
                pl.BlockSpec((1, out_feats), lambda i, k: (0, 0)),        # bias
                pl.BlockSpec((1, out_feats), lambda i, k: (0, 0)),        # gamma
                pl.BlockSpec((1, out_feats), lambda i, k: (0, 0)),        # beta
            ],
            out_specs=pl.BlockSpec((block_m, out_feats), lambda i, k: (i, 0))),
        compiler_params=pltpu.CompilerParams(**cp_kwargs),
    )(a_norm, hwa, hwh, b, gamma, beta)


# -------------------------------- parameters --------------------------------------
def init_params(key, in_feats, n_hidden, n_classes, n_layers):
    """Mirror GcnSAGE.__init__ / GcnSAGELayer.reset_parameters (uniform +-stdv).

    Weight slicing/transpose, bf16 casts and (1, out) reshapes are hoisted here
    so the forward path does no per-layer layout or dtype work.
    """
    dims = ([(in_feats, n_hidden)]
            + [(n_hidden, n_hidden)] * (n_layers - 2)
            + [(n_hidden, n_classes)])
    params = []
    for fin, fout in dims:
        key, k1, k2 = jax.random.split(key, 3)
        stdv = 1.0 / math.sqrt(2 * fin)
        w = jax.random.uniform(k1, (fout, 2 * fin), jnp.float32, -stdv, stdv)
        b = jax.random.uniform(k2, (fout,), jnp.float32, -stdv, stdv)
        wh = w[:, :fin].T.astype(jnp.bfloat16)   # (in, out) -- h half of concat weight
        wa = w[:, fin:].T.astype(jnp.bfloat16)   # (in, out) -- ah half
        params.append((wh, wa,
                       b.reshape(1, fout),
                       jnp.ones((1, fout), jnp.float32),   # LayerNorm gamma
                       jnp.zeros((1, fout), jnp.float32))) # LayerNorm beta
    return params


def prepare_adjacency(a, norm, block_m, block_k):
    """Fold 1/in_degree into A, cast to bf16, pad rows->block_m / cols->block_k.

    For a static graph call this once (outside jit/forward) and pass the result
    to gcn_sage_forward(a_norm=...) to avoid the N^2 f32 rescale every call.
    """
    n = a.shape[0]
    pad_r = _round_up(n, block_m) - n
    pad_c = _round_up(n, block_k) - n
    a_norm = (a * norm).astype(jnp.bfloat16)
    return jnp.pad(a_norm, ((0, pad_r), (0, pad_c)))


# ---------------------------------- forward ---------------------------------------
def gcn_sage_forward(a, norm, feat, params, *, block_m=512, block_k=2048, a_norm=None):
    """Full GcnSAGE forward.  Dropouts are identity at inference time.

    Padded-row invariant: rows/cols >= N of A_norm are all-zero, so whatever
    (junk) values padded rows of h acquire after LayerNorm never contribute to
    real outputs; padded output rows are sliced off at the end.
    """
    n = feat.shape[0]
    bm, bk = _pick_tiles(n, block_m, block_k)
    assert bm % 16 == 0 and bk % 128 == 0
    if a_norm is None:
        a_norm = prepare_adjacency(a, norm, bm, bk)
    n_rows, n_cols = a_norm.shape
    h = jnp.pad(feat, ((0, n_rows - n), (0, 0)))

    max_out = max(p[0].shape[1] for p in params)
    vmem_limit = _vmem_limit_bytes(bm, bk, max_out)

    n_layers = len(params)
    for i, (wh, wa, b, gamma, beta) in enumerate(params):
        last = i == n_layers - 1
        hwa, hwh = project_h(h, wa, wh, block_m=bm)
        # Align hwa's row count with A_norm's column (K) extent: extra rows (if
        # any) multiply all-zero A columns, so their values never contribute.
        if n_cols > n_rows:
            hwa = jnp.pad(hwa, ((0, n_cols - n_rows), (0, 0)))
        elif n_cols < n_rows:
            hwa = hwa[:n_cols]
        # last layer: activation=None, use_lynorm=False (matches GcnSAGE.__init__)
        h = gcn_sage_layer(a_norm, hwa, hwh, b, gamma, beta,
                           use_ln=not last, use_act=not last,
                           block_m=bm, block_k=bk,
                           vmem_limit_bytes=vmem_limit)
    return h[:n]


# ------------------------------ pure-JAX reference --------------------------------
def _reference_forward(a, norm, feat, params):
    h = feat
    for i, (wh, wa, b, gamma, beta) in enumerate(params):
        last = i == len(params) - 1
        wh32 = wh.astype(jnp.float32)
        wa32 = wa.astype(jnp.float32)
        ah = (a @ h) * norm
        z = h @ wh32 + ah @ wa32 + b
        if not last:
            mean = jnp.mean(z, axis=-1, keepdims=True)
            var = jnp.mean((z - mean) ** 2, axis=-1, keepdims=True)
            z = (z - mean) * jax.lax.rsqrt(var + 1e-5)
            z = z * gamma + beta
            z = jnp.maximum(z, 0.0)
        h = z
    return h


def _make_graph(key, n, in_feats):
    k_adj, k_ef, k_feat = jax.random.split(key, 3)
    adj_mask = (jax.random.uniform(k_adj, (n, n)) < 0.3).astype(jnp.float32)
    edge_feat = jax.random.uniform(k_ef, (n, n), jnp.float32, 0.5, 1.5)
    a = adj_mask * edge_feat                        # A[dst, src] = edge 'feat'
    in_deg = jnp.sum(adj_mask, axis=1, keepdims=True)
    norm = jnp.where(in_deg > 0, 1.0 / jnp.maximum(in_deg, 1.0), 0.0)
    feat = jax.random.normal(k_feat, (n, in_feats), jnp.float32)
    return a, norm, feat


if __name__ == "__main__":
    key = jax.random.PRNGKey(0)
    in_feats, n_hidden, n_classes, n_layers = 8, 32, 4, 3
    k_g1, k_g2, k_par = jax.random.split(key, 3)
    params = init_params(k_par, in_feats, n_hidden, n_classes, n_layers)

    # Small graph, default tile request (auto-shrunk to the graph): single K step.
    N1 = 16
    a1, norm1, feat1 = _make_graph(k_g1, N1, in_feats)
    out1 = gcn_sage_forward(a1, norm1, feat1, params)
    jax.block_until_ready(out1)
    ref1 = _reference_forward(a1, norm1, feat1, params)
    assert out1.shape == (N1, n_classes) and out1.dtype == jnp.float32
    assert jnp.allclose(out1, ref1, rtol=5e-2, atol=5e-2), \
        float(jnp.max(jnp.abs(out1 - ref1)))

    # Non-tile-multiple graph with small explicit tiles: exercises multi-step K
    # accumulation into the resident output block (pl.when init/finalize),
    # multiple 'parallel' row tiles, and independent row/col padding.
    N2 = 300
    a2, norm2, feat2 = _make_graph(k_g2, N2, in_feats)
    out2 = gcn_sage_forward(a2, norm2, feat2, params, block_m=64, block_k=128)
    jax.block_until_ready(out2)
    ref2 = _reference_forward(a2, norm2, feat2, params)
    assert out2.shape == (N2, n_classes) and out2.dtype == jnp.float32
    assert jnp.allclose(out2, ref2, rtol=5e-2, atol=5e-2), \
        float(jnp.max(jnp.abs(out2 - ref2)))

    print("KERNEL_OK")
</pallas_src>

<mosaic_0001>
module attributes {stable_mosaic.version = 11 : i64} {
  func.func @_proj_kernel(%arg0: i32, %arg1: memref<16x8xf32, #tpu.memory_space<vmem>>, %arg2: memref<8x32xbf16, #tpu.memory_space<vmem>>, %arg3: memref<8x32xbf16, #tpu.memory_space<vmem>>, %arg4: memref<16x32xbf16, #tpu.memory_space<vmem>>, %arg5: memref<16x32xf32, #tpu.memory_space<vmem>>) attributes {dimension_semantics = [#tpu.dimension_semantics<parallel>], iteration_bounds = array<i64: 1>, scalar_prefetch = 0 : i64, scratch_operands = 0 : i64, tpu.core_type = #tpu.core_type<tc>, window_params = [{transform_indices = @transform_0, window_bounds = array<i64: 16, 8>}, {pipeline_mode = #tpu.pipeline_mode<synchronous>, transform_indices = @transform_1, window_bounds = array<i64: 8, 32>}, {pipeline_mode = #tpu.pipeline_mode<synchronous>, transform_indices = @transform_2, window_bounds = array<i64: 8, 32>}, {transform_indices = @transform_3, window_bounds = array<i64: 16, 32>}, {transform_indices = @transform_4, window_bounds = array<i64: 16, 32>}]} {
    %c0 = arith.constant 0 : index
    %c0_0 = arith.constant 0 : index
    %0 = vector.load %arg1[%c0, %c0_0] : memref<16x8xf32, #tpu.memory_space<vmem>>, vector<16x8xf32>
    %1 = arith.truncf %0 : vector<16x8xf32> to vector<16x8xbf16>
    %c0_1 = arith.constant 0 : index
    %c0_2 = arith.constant 0 : index
    %2 = vector.load %arg2[%c0_1, %c0_2] : memref<8x32xbf16, #tpu.memory_space<vmem>>, vector<8x32xbf16>
    %cst = arith.constant dense<0.000000e+00> : vector<16x32xf32>
    %3 = tpu.matmul %1, %2, %cst {dimension_numbers = #tpu.dot_dimension_numbers<[1], [0], [0], [1], [0, 0, 1, 1], [], []>} : vector<16x8xbf16>, vector<8x32xbf16>, vector<16x32xf32> -> vector<16x32xf32>
    %4 = arith.truncf %3 : vector<16x32xf32> to vector<16x32xbf16>
    %c0_3 = arith.constant 0 : index
    %c0_4 = arith.constant 0 : index
    %5 = vector.load %arg4[%c0_3, %c0_4] : memref<16x32xbf16, #tpu.memory_space<vmem>>, vector<16x32xbf16>
    tpu.vector_store %arg4[%c0_3, %c0_4], %4 {strides = array<i32>} : memref<16x32xbf16, #tpu.memory_space<vmem>>, vector<16x32xbf16>,
    %c0_5 = arith.constant 0 : index
    %c0_6 = arith.constant 0 : index
    %6 = vector.load %arg3[%c0_5, %c0_6] : memref<8x32xbf16, #tpu.memory_space<vmem>>, vector<8x32xbf16>
    %cst_7 = arith.constant dense<0.000000e+00> : vector<16x32xf32>
    %7 = tpu.matmul %1, %6, %cst_7 {dimension_numbers = #tpu.dot_dimension_numbers<[1], [0], [0], [1], [0, 0, 1, 1], [], []>} : vector<16x8xbf16>, vector<8x32xbf16>, vector<16x32xf32> -> vector<16x32xf32>
    %c0_8 = arith.constant 0 : index
    %c0_9 = arith.constant 0 : index
    %8 = vector.load %arg5[%c0_8, %c0_9] : memref<16x32xf32, #tpu.memory_space<vmem>>, vector<16x32xf32>
    tpu.vector_store %arg5[%c0_8, %c0_9], %7 {strides = array<i32>} : memref<16x32xf32, #tpu.memory_space<vmem>>, vector<16x32xf32>,
    return
  }
  func.func @transform_0(%arg0: i32) -> (i32, i32) {
    %c0_i32 = arith.constant 0 : i32
    %c0_i32_0 = arith.constant 0 : i32
    return %arg0, %c0_i32 : i32, i32
  }
  func.func @transform_1(%arg0: i32) -> (i32, i32) {
    %c0_i32 = arith.constant 0 : i32
    %c0_i32_0 = arith.constant 0 : i32
    %c0_i32_1 = arith.constant 0 : i32
    return %c0_i32, %c0_i32_0 : i32, i32
  }
  func.func @transform_2(%arg0: i32) -> (i32, i32) {
    %c0_i32 = arith.constant 0 : i32
    %c0_i32_0 = arith.constant 0 : i32
    %c0_i32_1 = arith.constant 0 : i32
    return %c0_i32, %c0_i32_0 : i32, i32
  }
  func.func @transform_3(%arg0: i32) -> (i32, i32) {
    %c0_i32 = arith.constant 0 : i32
    %c0_i32_0 = arith.constant 0 : i32
    return %arg0, %c0_i32 : i32, i32
  }
  func.func @transform_4(%arg0: i32) -> (i32, i32) {
    %c0_i32 = arith.constant 0 : i32
    %c0_i32_0 = arith.constant 0 : i32
    return %arg0, %c0_i32 : i32, i32
  }
}

</mosaic_0001>

<llo_original>
// kernel: tpu_custom_call.1
$region0: #{tpu_custom_call.1}
  #allocation0 [shape = 'u32[]', space=smem, size = 0x4, offset = 0x4, fixed_abs, tag = 'smem constant byte address 0x4 - core index']
  #allocation1 [shape = 'u32[72,128]{1,0:T(1,128)}', space=vmem, size = 0x9000, scoped, tag = 'internal scratch']
  %s0 = inlined_call_operand.vmem [shape: f32[16,8], index: 0, kind: input, shape index: {}]
  %s1 = inlined_call_operand.vmem [shape: bf16[8,32], index: 1, kind: input, shape index: {}]
  %s2 = inlined_call_operand.vmem [shape: bf16[8,32], index: 2, kind: input, shape index: {}]
  %s3 = inlined_call_operand.hbm [shape: bf16[16,32], index: 3, kind: output, shape index: {0}]
  %s4 = inlined_call_operand.hbm [shape: f32[16,32], index: 4, kind: output, shape index: {1}]
  %5 = xla_tuple %s3, %s4
  %s6 = sld [smem:[#allocation0]]
  $region30: #{tpu_custom_call.1} parent=0
    _
  %s8 = ssub.s32 1, %s6
  %s9 = scalar_select 0, %s8, %s6
  $region1: #{tpu_custom_call.1} parent=0
    #allocation2 [shape = 'u8[4096]{0}', space=vmem, size = 0x1000, scoped, tag = 'output window, operand 0, single buffered']
    #allocation3 [shape = 's32[1]{0}', space=sflag, size = 0x4, scoped, tag = 'scoped memory for tpu_custom_call.1']
    #allocation4 [shape = 'u8[8192]{0}', space=vmem, size = 0x2000, scoped, tag = 'output window, operand 1, single buffered']
    #allocation5 [shape = 's32[1]{0}', space=sflag, size = 0x4, scoped, tag = 'scoped memory for tpu_custom_call.1']
    %10 = vsyncpa [#allocation3], 0
    %11 = vsyncpa [#allocation5], 0
    // Predicated region
    $region2: #{tpu_custom_call.1} parent=1 // pred_check
      _
    $region3: #{tpu_custom_call.1} parent=1 // pred_check_branch
      %13 = sbr.rel (0) target = $region5
    $region4: #{tpu_custom_call.1} parent=1 // pred_region
      _
    $region5: #{tpu_custom_call.1} parent=1 // pred_fallthru
      _
    // Predicated region
    $region6: #{tpu_custom_call.1} parent=1 // pred_check
      _
    $region7: #{tpu_custom_call.1} parent=1 // pred_check_branch
      %15 = sbr.rel (0) target = $region9
    $region8: #{tpu_custom_call.1} parent=1 // pred_region
      _
    $region9: #{tpu_custom_call.1} parent=1 // pred_fallthru
      _
    // Predicated region
    $region10: #{tpu_custom_call.1} parent=1 // pred_check
      _
    $region11: #{tpu_custom_call.1} parent=1 // pred_check_branch
      %17 = sbr.rel (0) target = $region13
    $region12: #{tpu_custom_call.1} parent=1 // pred_region
      _
    $region13: #{tpu_custom_call.1} parent=1 // pred_fallthru
      _
    %v19 = vld [vmem:[%s0] sm:$0xff]
    %v20 = vld [vmem:[%s0 + $0x8] sm:$0xff]
    %v21 = vpack.c.bf16 %v20, %v19
    %v22 = vld [vmem:[%s1] sm:$0xf]
    %vm23 = vcmask 64512
    %v25 = vsel %vm23, %v21, 0
    %vm27 = vcmask 1043456
    %v29 = vsel %vm27, %v22, 0
    %31 = vmatpush.bf16.msra.mxu0 0
    %32 = vmatpush.bf16.msra.mxu0 0
    %33 = vmatpush.bf16.msra.mxu0 0
    %34 = vmatpush.bf16.msra.mxu0 0
    %35 = vmatpush.bf16.msra.mxu0 0
    %36 = vmatpush.bf16.msra.mxu0 0
    %37 = vmatpush.bf16.msra.mxu0 0
    %38 = vmatpush.bf16.msra.mxu0 %v29
    %39 = vmatmul.bf16.gmra.mxu0 %v25
    %v40 = vpop.f32.mrf.mxu0
    %v41 = vadd.f32 0.0, %v40
    %v42 = vpop.f32.mrf.mxu0
    %v43 = vadd.f32 0.0, %v42
    %44 = vdwg.mxu0
    %v45 = vpack.c.bf16 %v41, %v41
    %v46 = vpack.c.bf16 %v43, %v43
    %vm47 = vcmask 257024
    %48 = vst.msk [vmem:[#allocation2] sm:$0xf] %vm47, %v45
    %49 = vst.msk [vmem:[#allocation2 + $0x4] sm:$0xf] %vm47, %v46
    %v50 = vld [vmem:[%s2] sm:$0xf]
    %v52 = vsel %vm27, %v50, 0
    %54 = vmatpush.bf16.msra.mxu0 0
    %55 = vmatpush.bf16.msra.mxu0 0
    %56 = vmatpush.bf16.msra.mxu0 0
    %57 = vmatpush.bf16.msra.mxu0 0
    %58 = vmatpush.bf16.msra.mxu0 0
    %59 = vmatpush.bf16.msra.mxu0 0
    %60 = vmatpush.bf16.msra.mxu0 0
    %61 = vmatpush.bf16.msra.mxu0 %v52
    %62 = vmatmul.bf16.gmra.mxu0 %v25
    %v63 = vpop.f32.mrf.mxu0
    %v64 = vadd.f32 0.0, %v63
    %v65 = vpop.f32.mrf.mxu0
    %v66 = vadd.f32 0.0, %v65
    %67 = vdwg.mxu0
    %vm68 = vcmask 261120
    %69 = vst.msk [vmem:[#allocation4] sm:$0xff] %vm68, %v64
    %70 = vst.msk [vmem:[#allocation4 + $0x8] sm:$0xff] %vm68, %v66
    // Predicated region
    $region14: #{tpu_custom_call.1} parent=1 // pred_check
      _
    $region15: #{tpu_custom_call.1} parent=1 // pred_check_branch
      %72 = sbr.rel (0) target = $region17
    $region16: #{tpu_custom_call.1} parent=1 // pred_region
      %74 = vsyncadd [#allocation3], 0
      %s75 = sshll.u32 [#allocation2], 4
      %s76 = int_to_ptr.vmem [resolvable:$true] %s75
      %s77 = sshll.u32 %s3, 4
      %s78 = int_to_ptr.hbm [resolvable:$true] %s77
      %83 = dma.vmem_to_hbm [thread:$0]  %s76, 128, %s78, [#allocation3], 64, 64, 4
    $region17: #{tpu_custom_call.1} parent=1 // pred_fallthru
      _
    // Predicated region
    $region18: #{tpu_custom_call.1} parent=1 // pred_check
      _
    $region19: #{tpu_custom_call.1} parent=1 // pred_check_branch
      %85 = sbr.rel (0) target = $region21
    $region20: #{tpu_custom_call.1} parent=1 // pred_region
      %87 = vsyncadd [#allocation5], 0
      %s88 = sshll.u32 [#allocation4], 4
      %s89 = int_to_ptr.vmem [resolvable:$true] %s88
      %s90 = sshll.u32 %s4, 4
      %s91 = int_to_ptr.hbm [resolvable:$true] %s90
      %96 = dma.vmem_to_hbm [thread:$0]  %s89, 256, %s91, [#allocation5], 128, 128, 8
    $region21: #{tpu_custom_call.1} parent=1 // pred_fallthru
      _
    // Predicated region
    $region22: #{tpu_custom_call.1} parent=1 // pred_check
      _
    $region23: #{tpu_custom_call.1} parent=1 // pred_check_branch
      %98 = sbr.rel (0) target = $region25
    $region24: #{tpu_custom_call.1} parent=1 // pred_region
      %100 = dma.done [#allocation3], 128
    $region25: #{tpu_custom_call.1} parent=1 // pred_fallthru
      _
    // Predicated region
    $region26: #{tpu_custom_call.1} parent=1 // pred_check
      _
    $region27: #{tpu_custom_call.1} parent=1 // pred_check_branch
      %102 = sbr.rel (0) target = $region29
    $region28: #{tpu_custom_call.1} parent=1 // pred_region
      %104 = dma.done [#allocation5], 256
    $region29: #{tpu_custom_call.1} parent=1 // pred_fallthru
      _
    %105 = vsyncpa [#allocation3], 1
    %106 = vsyncpa [#allocation5], 1

</llo_original>
